<compile_context>
chip_gen: v5e
topology: v5e:2x2
jax: 0.10.0
libtpu: 0.0.40
codegen_flags: <defaults>
</compile_context>

<pallas_src>
import functools

import jax
import jax.numpy as jnp
import numpy as np
from jax import lax
from jax.experimental import pallas as pl
from jax.experimental.pallas import tpu as pltpu


def _bottleneck_kernel(x_ref, wb1_ref, b1_ref, wb2_ref, b2_ref, o_ref,
                       *, N, H, W, c_mid, c_out):
    """Single grid step, whole batch.

    x_ref:   (N, H, W*c_in)        lane-dense input, bf16 (no spatial padding:
                                   padding is baked into banded weights / row shifts)
    wb1_ref: (3, W*c_in,  W*c_mid) banded conv1 weights (BN scale folded), bf16
    wb2_ref: (3, W*c_mid, W*c_out) banded conv2 weights (BN scale folded), bf16
    b1_ref:  (1, W*c_mid)          folded BN bias, tiled W times, f32
    b2_ref:  (1, W*c_out)          folded BN bias, tiled W times, f32
    o_ref:   (N, H, W*c_out)       lane-dense output, bf16
    """
    zrow1 = jnp.zeros((1, W * c_mid), jnp.float32)
    zrow2 = jnp.zeros((1, W * c_out), jnp.float32)
    b1 = b1_ref[...]
    b2 = b2_ref[...]

    def shift_down(p, zrow):      # out[0] = 0, out[h] = p[h-1]   (dh = 0 tap)
        return jnp.concatenate([zrow, p[:-1, :]], axis=0)

    def shift_up(p, zrow):        # out[H-1] = 0, out[h] = p[h+1] (dh = 2 tap)
        return jnp.concatenate([p[1:, :], zrow], axis=0)

    for n in range(N):            # static loop, no per-step pipeline overhead
        xn = x_ref[n]                                         # (H, W*c_in) bf16

        # ---- conv1: 3 banded MXU dots, lane-dense (H, W*c_mid) output ----
        p0 = jnp.dot(xn, wb1_ref[0], preferred_element_type=jnp.float32)
        p1 = jnp.dot(xn, wb1_ref[1], preferred_element_type=jnp.float32)
        p2 = jnp.dot(xn, wb1_ref[2], preferred_element_type=jnp.float32)
        acc1 = p1 + shift_down(p0, zrow1) + shift_up(p2, zrow1)

        # BN scale folded into weights; epilogue = bias + ReLU (f32, VPU).
        y1 = jnp.maximum(acc1 + b1, 0.0)
        # Dropout2d (p=0.3): identity at inference.
        y1 = y1.astype(jnp.bfloat16)                          # (H, W*c_mid)

        # ---- conv2: same banded structure ----
        q0 = jnp.dot(y1, wb2_ref[0], preferred_element_type=jnp.float32)
        q1 = jnp.dot(y1, wb2_ref[1], preferred_element_type=jnp.float32)
        q2 = jnp.dot(y1, wb2_ref[2], preferred_element_type=jnp.float32)
        acc2 = q1 + shift_down(q0, zrow2) + shift_up(q2, zrow2)

        y2 = jnp.maximum(acc2 + b2, 0.0)
        # Dropout2d (p=0.3): identity at inference.
        o_ref[n] = y2.astype(o_ref.dtype)                     # (H, W*c_out)


def _fold_bn(w, bn, eps):
    """Fold inference BN into per-output-channel weight scale + bias (f32)."""
    scale = bn["gamma"] / jnp.sqrt(bn["var"] + eps)
    bias = bn["beta"] - bn["mean"] * scale
    w_folded = w.astype(jnp.float32) * scale.reshape(1, 1, 1, -1)
    return w_folded, bias.astype(jnp.float32)


def _make_band(k_hwio, W):
    """(3, 3, cin, cout) HWIO kernel -> (3, W*cin, W*cout) block-Toeplitz bands.

    band[dh, wi*cin + ci, wo*cout + co] = k[dh, wi-wo+1, ci, co] if |wi-wo| <= 1
    else 0.  The zero blocks implement the conv's column (width) zero-padding.
    """
    _, _, cin, cout = k_hwio.shape
    wi = jnp.arange(W)[:, None]
    wo = jnp.arange(W)[None, :]
    dw = wi - wo + 1                                          # (W, W)
    valid = ((dw >= 0) & (dw <= 2)).astype(k_hwio.dtype)
    dw_c = jnp.clip(dw, 0, 2)
    band = k_hwio[:, dw_c]                                    # (3, W, W, cin, cout)
    band = band * valid[None, :, :, None, None]
    band = jnp.transpose(band, (0, 1, 3, 2, 4))               # (3, W, cin, W, cout)
    return band.reshape(3, W * cin, W * cout)


def bottleneck_forward(x_nchw, w1, bn1, w2, bn2, eps=1e-5):
    """x_nchw: (N, in_1, H, W). w1: (3,3,in_1,out_1) HWIO. w2: (3,3,in_2,out_2).
    bn*: dict with gamma, beta, mean, var (per-channel, inference stats)."""
    N, c_in, H, W = x_nchw.shape
    c_mid = w1.shape[-1]
    c_out = w2.shape[-1]
    assert w2.shape[2] == c_mid, "in_2 must equal out_1"

    # NCHW -> NHWC -> lane-dense (N, H, W*Cin), bf16 matmul operand.
    x = jnp.transpose(x_nchw, (0, 2, 3, 1))
    x_k = x.reshape(N, H, W * c_in).astype(jnp.bfloat16)

    # Fold BN scale into the conv weights, then build banded weights.
    w1_f, b1 = _fold_bn(w1, bn1, eps)
    w2_f, b2 = _fold_bn(w2, bn2, eps)
    wb1 = _make_band(w1_f, W).astype(jnp.bfloat16)            # (3, W*c_in,  W*c_mid)
    wb2 = _make_band(w2_f, W).astype(jnp.bfloat16)            # (3, W*c_mid, W*c_out)
    b1_k = jnp.tile(b1, W).reshape(1, W * c_mid).astype(jnp.float32)
    b2_k = jnp.tile(b2, W).reshape(1, W * c_out).astype(jnp.float32)

    kernel = functools.partial(_bottleneck_kernel, N=N, H=H, W=W,
                               c_mid=c_mid, c_out=c_out)

    flops = 2 * N * H * 3 * ((W * c_in) * (W * c_mid) + (W * c_mid) * (W * c_out))
    bytes_accessed = (x_k.size * 2 + wb1.size * 2 + wb2.size * 2
                      + b1_k.size * 4 + b2_k.size * 4 + N * H * W * c_out * 2)

    # Total VMEM footprint is a few hundred KiB; far under the default scoped
    # limit on v5e/v6e/v7x, so no explicit vmem_limit_bytes needed.
    out = pl.pallas_call(
        kernel,
        out_shape=jax.ShapeDtypeStruct((N, H, W * c_out), jnp.bfloat16),
        grid_spec=pltpu.PrefetchScalarGridSpec(
            num_scalar_prefetch=0,
            grid=(1,),
            in_specs=[
                pl.BlockSpec((N, H, W * c_in), lambda i: (0, 0, 0)),
                pl.BlockSpec((3, W * c_in, W * c_mid), lambda i: (0, 0, 0)),
                pl.BlockSpec((1, W * c_mid), lambda i: (0, 0)),
                pl.BlockSpec((3, W * c_mid, W * c_out), lambda i: (0, 0, 0)),
                pl.BlockSpec((1, W * c_out), lambda i: (0, 0)),
            ],
            out_specs=pl.BlockSpec((N, H, W * c_out), lambda i: (0, 0, 0)),
        ),
        compiler_params=pltpu.CompilerParams(
            dimension_semantics=("arbitrary",)),
        cost_estimate=pl.CostEstimate(flops=flops, transcendentals=0,
                                      bytes_accessed=bytes_accessed),
    )(x_k, wb1, b1_k, wb2, b2_k)

    # (N, H, W*c_out) -> NCHW f32 to match the PyTorch module's convention.
    out = out.reshape(N, H, W, c_out).astype(jnp.float32)
    return jnp.transpose(out, (0, 3, 1, 2))


def _reference_forward(x_nchw, w1, bn1, w2, bn2, eps=1e-5, quantize=False):
    """Pure-JAX reference (lax conv, NHWC/HWIO). If quantize=True, mimics the
    kernel's bf16 operand/activation quantization so tolerances stay tight."""
    x = jnp.transpose(x_nchw, (0, 2, 3, 1)).astype(jnp.float32)
    w1_f, b1 = _fold_bn(w1, bn1, eps)
    w2_f, b2 = _fold_bn(w2, bn2, eps)
    if quantize:
        x = x.astype(jnp.bfloat16).astype(jnp.float32)
        w1_f = w1_f.astype(jnp.bfloat16).astype(jnp.float32)
        w2_f = w2_f.astype(jnp.bfloat16).astype(jnp.float32)

    def conv_bias_relu(x, w, b):
        y = lax.conv_general_dilated(
            x, w, window_strides=(1, 1), padding="SAME",
            dimension_numbers=("NHWC", "HWIO", "NHWC"))
        return jnp.maximum(y + b, 0.0)

    y = conv_bias_relu(x, w1_f, b1)
    if quantize:
        y = y.astype(jnp.bfloat16).astype(jnp.float32)
    y = conv_bias_relu(y, w2_f, b2)
    if quantize:
        y = y.astype(jnp.bfloat16).astype(jnp.float32)
    return jnp.transpose(y, (0, 3, 1, 2))


if __name__ == "__main__":
    # BottleNeck(in_1=4, out_1=8, in_2=8, out_2=8); input (2, 4, 16, 16).
    # W * out_2 = 16 * 8 = 128 -> lane-dense output rows.
    in_1, out_1, in_2, out_2 = 4, 8, 8, 8
    N, H, W = 2, 16, 16

    key = jax.random.PRNGKey(0)
    ks = jax.random.split(key, 11)

    x = jax.random.normal(ks[0], (N, in_1, H, W), dtype=jnp.float32)

    # Conv weights in HWIO layout (3, 3, Cin, Cout).
    w1 = jax.random.normal(ks[1], (3, 3, in_1, out_1), dtype=jnp.float32) * 0.2
    w2 = jax.random.normal(ks[2], (3, 3, in_2, out_2), dtype=jnp.float32) * 0.2

    bn1 = dict(
        gamma=jax.random.normal(ks[3], (out_1,)) * 0.1 + 1.0,
        beta=jax.random.normal(ks[4], (out_1,)) * 0.1,
        mean=jax.random.normal(ks[5], (out_1,)) * 0.1,
        var=jnp.abs(jax.random.normal(ks[6], (out_1,))) * 0.5 + 0.5,
    )
    bn2 = dict(
        gamma=jax.random.normal(ks[7], (out_2,)) * 0.1 + 1.0,
        beta=jax.random.normal(ks[8], (out_2,)) * 0.1,
        mean=jax.random.normal(ks[9], (out_2,)) * 0.1,
        var=jnp.abs(jax.random.normal(ks[10], (out_2,))) * 0.5 + 0.5,
    )

    out = bottleneck_forward(x, w1, bn1, w2, bn2)
    out = jax.block_until_ready(out)

    # Tight check vs. a reference that uses the same bf16 quantization
    # (validates banded-weight construction / BN folding / ReLU / row shifts).
    ref_q = _reference_forward(x, w1, bn1, w2, bn2, quantize=True)
    np.testing.assert_allclose(np.asarray(out), np.asarray(ref_q),
                               rtol=2e-2, atol=2e-2)

    # Loose sanity check vs. the full-f32 reference (bf16 quantization error
    # is the only difference).
    ref_f32 = _reference_forward(x, w1, bn1, w2, bn2, quantize=False)
    np.testing.assert_allclose(np.asarray(out), np.asarray(ref_f32),
                               rtol=1e-1, atol=1e-1)

    print("KERNEL_OK")
</pallas_src>

<mosaic_0001>
module attributes {stable_mosaic.version = 11 : i64} {
  func.func @_bottleneck_kernel(%arg0: i32, %arg1: memref<2x16x64xbf16, #tpu.memory_space<vmem>>, %arg2: memref<3x64x128xbf16, #tpu.memory_space<vmem>>, %arg3: memref<1x128xf32, #tpu.memory_space<vmem>>, %arg4: memref<3x128x128xbf16, #tpu.memory_space<vmem>>, %arg5: memref<1x128xf32, #tpu.memory_space<vmem>>, %arg6: memref<2x16x128xbf16, #tpu.memory_space<vmem>>) attributes {dimension_semantics = [#tpu.dimension_semantics<arbitrary>], iteration_bounds = array<i64: 1>, scalar_prefetch = 0 : i64, scratch_operands = 0 : i64, tpu.core_type = #tpu.core_type<tc>, window_params = [{pipeline_mode = #tpu.pipeline_mode<synchronous>, transform_indices = @transform_0, window_bounds = array<i64: 2, 16, 64>}, {pipeline_mode = #tpu.pipeline_mode<synchronous>, transform_indices = @transform_1, window_bounds = array<i64: 3, 64, 128>}, {pipeline_mode = #tpu.pipeline_mode<synchronous>, transform_indices = @transform_2, window_bounds = array<i64: 1, 128>}, {pipeline_mode = #tpu.pipeline_mode<synchronous>, transform_indices = @transform_3, window_bounds = array<i64: 3, 128, 128>}, {pipeline_mode = #tpu.pipeline_mode<synchronous>, transform_indices = @transform_4, window_bounds = array<i64: 1, 128>}, {pipeline_mode = #tpu.pipeline_mode<synchronous>, transform_indices = @transform_5, window_bounds = array<i64: 2, 16, 128>}]} {
    %cst = arith.constant 0.000000e+00 : f32
    %0 = vector.broadcast %cst : f32 to vector<1x128xf32>
    %cst_0 = arith.constant 0.000000e+00 : f32
    %1 = vector.broadcast %cst_0 : f32 to vector<1x128xf32>
    %c0 = arith.constant 0 : index
    %c0_1 = arith.constant 0 : index
    %2 = vector.load %arg3[%c0, %c0_1] : memref<1x128xf32, #tpu.memory_space<vmem>>, vector<1x128xf32>
    %c0_2 = arith.constant 0 : index
    %c0_3 = arith.constant 0 : index
    %3 = vector.load %arg5[%c0_2, %c0_3] : memref<1x128xf32, #tpu.memory_space<vmem>>, vector<1x128xf32>
    %c0_4 = arith.constant 0 : index
    %c0_5 = arith.constant 0 : index
    %c0_6 = arith.constant 0 : index
    %4 = vector.load %arg1[%c0_4, %c0_5, %c0_6] : memref<2x16x64xbf16, #tpu.memory_space<vmem>>, vector<1x16x64xbf16>
    %5 = vector.shape_cast %4 : vector<1x16x64xbf16> to vector<16x64xbf16>
    %c0_7 = arith.constant 0 : index
    %c0_8 = arith.constant 0 : index
    %c0_9 = arith.constant 0 : index
    %6 = vector.load %arg2[%c0_7, %c0_8, %c0_9] : memref<3x64x128xbf16, #tpu.memory_space<vmem>>, vector<1x64x128xbf16>
    %7 = vector.shape_cast %6 : vector<1x64x128xbf16> to vector<64x128xbf16>
    %cst_10 = arith.constant dense<0.000000e+00> : vector<16x128xf32>
    %8 = tpu.matmul %5, %7, %cst_10 {dimension_numbers = #tpu.dot_dimension_numbers<[1], [0], [0], [1], [0, 0, 1, 1], [], []>} : vector<16x64xbf16>, vector<64x128xbf16>, vector<16x128xf32> -> vector<16x128xf32>
    %c1 = arith.constant 1 : index
    %c0_11 = arith.constant 0 : index
    %c0_12 = arith.constant 0 : index
    %9 = vector.load %arg2[%c1, %c0_11, %c0_12] : memref<3x64x128xbf16, #tpu.memory_space<vmem>>, vector<1x64x128xbf16>
    %10 = vector.shape_cast %9 : vector<1x64x128xbf16> to vector<64x128xbf16>
    %cst_13 = arith.constant dense<0.000000e+00> : vector<16x128xf32>
    %11 = tpu.matmul %5, %10, %cst_13 {dimension_numbers = #tpu.dot_dimension_numbers<[1], [0], [0], [1], [0, 0, 1, 1], [], []>} : vector<16x64xbf16>, vector<64x128xbf16>, vector<16x128xf32> -> vector<16x128xf32>
    %c2 = arith.constant 2 : index
    %c0_14 = arith.constant 0 : index
    %c0_15 = arith.constant 0 : index
    %12 = vector.load %arg2[%c2, %c0_14, %c0_15] : memref<3x64x128xbf16, #tpu.memory_space<vmem>>, vector<1x64x128xbf16>
    %13 = vector.shape_cast %12 : vector<1x64x128xbf16> to vector<64x128xbf16>
    %cst_16 = arith.constant dense<0.000000e+00> : vector<16x128xf32>
    %14 = tpu.matmul %5, %13, %cst_16 {dimension_numbers = #tpu.dot_dimension_numbers<[1], [0], [0], [1], [0, 0, 1, 1], [], []>} : vector<16x64xbf16>, vector<64x128xbf16>, vector<16x128xf32> -> vector<16x128xf32>
    %15 = vector.extract_strided_slice %8 {offsets = [0, 0], sizes = [15, 128], strides = [1, 1]} : vector<16x128xf32> to vector<15x128xf32>
    %16 = tpu.concatenate %0, %15 in 0 : vector<1x128xf32>, vector<15x128xf32> -> vector<16x128xf32>
    %17 = arith.addf %11, %16 : vector<16x128xf32>
    %18 = vector.extract_strided_slice %14 {offsets = [1, 0], sizes = [15, 128], strides = [1, 1]} : vector<16x128xf32> to vector<15x128xf32>
    %19 = tpu.concatenate %18, %0 in 0 : vector<15x128xf32>, vector<1x128xf32> -> vector<16x128xf32>
    %20 = arith.addf %17, %19 : vector<16x128xf32>
    %21 = vector.broadcast %2 : vector<1x128xf32> to vector<16x128xf32>
    %22 = arith.addf %20, %21 : vector<16x128xf32>
    %cst_17 = arith.constant 0.000000e+00 : f32
    %23 = vector.broadcast %cst_17 : f32 to vector<16x128xf32>
    %24 = arith.maximumf %22, %23 : vector<16x128xf32>
    %25 = arith.truncf %24 : vector<16x128xf32> to vector<16x128xbf16>
    %c0_18 = arith.constant 0 : index
    %c0_19 = arith.constant 0 : index
    %c0_20 = arith.constant 0 : index
    %26 = vector.load %arg4[%c0_18, %c0_19, %c0_20] : memref<3x128x128xbf16, #tpu.memory_space<vmem>>, vector<1x128x128xbf16>
    %27 = vector.shape_cast %26 : vector<1x128x128xbf16> to vector<128x128xbf16>
    %cst_21 = arith.constant dense<0.000000e+00> : vector<16x128xf32>
    %28 = tpu.matmul %25, %27, %cst_21 {dimension_numbers = #tpu.dot_dimension_numbers<[1], [0], [0], [1], [0, 0, 1, 1], [], []>} : vector<16x128xbf16>, vector<128x128xbf16>, vector<16x128xf32> -> vector<16x128xf32>
    %c1_22 = arith.constant 1 : index
    %c0_23 = arith.constant 0 : index
    %c0_24 = arith.constant 0 : index
    %29 = vector.load %arg4[%c1_22, %c0_23, %c0_24] : memref<3x128x128xbf16, #tpu.memory_space<vmem>>, vector<1x128x128xbf16>
    %30 = vector.shape_cast %29 : vector<1x128x128xbf16> to vector<128x128xbf16>
    %cst_25 = arith.constant dense<0.000000e+00> : vector<16x128xf32>
    %31 = tpu.matmul %25, %30, %cst_25 {dimension_numbers = #tpu.dot_dimension_numbers<[1], [0], [0], [1], [0, 0, 1, 1], [], []>} : vector<16x128xbf16>, vector<128x128xbf16>, vector<16x128xf32> -> vector<16x128xf32>
    %c2_26 = arith.constant 2 : index
    %c0_27 = arith.constant 0 : index
    %c0_28 = arith.constant 0 : index
    %32 = vector.load %arg4[%c2_26, %c0_27, %c0_28] : memref<3x128x128xbf16, #tpu.memory_space<vmem>>, vector<1x128x128xbf16>
    %33 = vector.shape_cast %32 : vector<1x128x128xbf16> to vector<128x128xbf16>
    %cst_29 = arith.constant dense<0.000000e+00> : vector<16x128xf32>
    %34 = tpu.matmul %25, %33, %cst_29 {dimension_numbers = #tpu.dot_dimension_numbers<[1], [0], [0], [1], [0, 0, 1, 1], [], []>} : vector<16x128xbf16>, vector<128x128xbf16>, vector<16x128xf32> -> vector<16x128xf32>
    %35 = vector.extract_strided_slice %28 {offsets = [0, 0], sizes = [15, 128], strides = [1, 1]} : vector<16x128xf32> to vector<15x128xf32>
    %36 = tpu.concatenate %1, %35 in 0 : vector<1x128xf32>, vector<15x128xf32> -> vector<16x128xf32>
    %37 = arith.addf %31, %36 : vector<16x128xf32>
    %38 = vector.extract_strided_slice %34 {offsets = [1, 0], sizes = [15, 128], strides = [1, 1]} : vector<16x128xf32> to vector<15x128xf32>
    %39 = tpu.concatenate %38, %1 in 0 : vector<15x128xf32>, vector<1x128xf32> -> vector<16x128xf32>
    %40 = arith.addf %37, %39 : vector<16x128xf32>
    %41 = vector.broadcast %3 : vector<1x128xf32> to vector<16x128xf32>
    %42 = arith.addf %40, %41 : vector<16x128xf32>
    %cst_30 = arith.constant 0.000000e+00 : f32
    %43 = vector.broadcast %cst_30 : f32 to vector<16x128xf32>
    %44 = arith.maximumf %42, %43 : vector<16x128xf32>
    %45 = arith.truncf %44 : vector<16x128xf32> to vector<16x128xbf16>
    %c0_31 = arith.constant 0 : index
    %c0_32 = arith.constant 0 : index
    %c0_33 = arith.constant 0 : index
    %46 = vector.load %arg6[%c0_31, %c0_32, %c0_33] : memref<2x16x128xbf16, #tpu.memory_space<vmem>>, vector<1x16x128xbf16>
    %47 = vector.shape_cast %46 : vector<1x16x128xbf16> to vector<16x128xbf16>
    %48 = vector.shape_cast %45 : vector<16x128xbf16> to vector<1x16x128xbf16>
    tpu.vector_store %arg6[%c0_31, %c0_32, %c0_33], %48 {strides = array<i32>} : memref<2x16x128xbf16, #tpu.memory_space<vmem>>, vector<1x16x128xbf16>,
    %c1_34 = arith.constant 1 : index
    %c0_35 = arith.constant 0 : index
    %c0_36 = arith.constant 0 : index
    %49 = vector.load %arg1[%c1_34, %c0_35, %c0_36] : memref<2x16x64xbf16, #tpu.memory_space<vmem>>, vector<1x16x64xbf16>
    %50 = vector.shape_cast %49 : vector<1x16x64xbf16> to vector<16x64xbf16>
    %c0_37 = arith.constant 0 : index
    %c0_38 = arith.constant 0 : index
    %c0_39 = arith.constant 0 : index
    %51 = vector.load %arg2[%c0_37, %c0_38, %c0_39] : memref<3x64x128xbf16, #tpu.memory_space<vmem>>, vector<1x64x128xbf16>
    %52 = vector.shape_cast %51 : vector<1x64x128xbf16> to vector<64x128xbf16>
    %cst_40 = arith.constant dense<0.000000e+00> : vector<16x128xf32>
    %53 = tpu.matmul %50, %52, %cst_40 {dimension_numbers = #tpu.dot_dimension_numbers<[1], [0], [0], [1], [0, 0, 1, 1], [], []>} : vector<16x64xbf16>, vector<64x128xbf16>, vector<16x128xf32> -> vector<16x128xf32>
    %c1_41 = arith.constant 1 : index
    %c0_42 = arith.constant 0 : index
    %c0_43 = arith.constant 0 : index
    %54 = vector.load %arg2[%c1_41, %c0_42, %c0_43] : memref<3x64x128xbf16, #tpu.memory_space<vmem>>, vector<1x64x128xbf16>
    %55 = vector.shape_cast %54 : vector<1x64x128xbf16> to vector<64x128xbf16>
    %cst_44 = arith.constant dense<0.000000e+00> : vector<16x128xf32>
    %56 = tpu.matmul %50, %55, %cst_44 {dimension_numbers = #tpu.dot_dimension_numbers<[1], [0], [0], [1], [0, 0, 1, 1], [], []>} : vector<16x64xbf16>, vector<64x128xbf16>, vector<16x128xf32> -> vector<16x128xf32>
    %c2_45 = arith.constant 2 : index
    %c0_46 = arith.constant 0 : index
    %c0_47 = arith.constant 0 : index
    %57 = vector.load %arg2[%c2_45, %c0_46, %c0_47] : memref<3x64x128xbf16, #tpu.memory_space<vmem>>, vector<1x64x128xbf16>
    %58 = vector.shape_cast %57 : vector<1x64x128xbf16> to vector<64x128xbf16>
    %cst_48 = arith.constant dense<0.000000e+00> : vector<16x128xf32>
    %59 = tpu.matmul %50, %58, %cst_48 {dimension_numbers = #tpu.dot_dimension_numbers<[1], [0], [0], [1], [0, 0, 1, 1], [], []>} : vector<16x64xbf16>, vector<64x128xbf16>, vector<16x128xf32> -> vector<16x128xf32>
    %60 = vector.extract_strided_slice %53 {offsets = [0, 0], sizes = [15, 128], strides = [1, 1]} : vector<16x128xf32> to vector<15x128xf32>
    %61 = tpu.concatenate %0, %60 in 0 : vector<1x128xf32>, vector<15x128xf32> -> vector<16x128xf32>
    %62 = arith.addf %56, %61 : vector<16x128xf32>
    %63 = vector.extract_strided_slice %59 {offsets = [1, 0], sizes = [15, 128], strides = [1, 1]} : vector<16x128xf32> to vector<15x128xf32>
    %64 = tpu.concatenate %63, %0 in 0 : vector<15x128xf32>, vector<1x128xf32> -> vector<16x128xf32>
    %65 = arith.addf %62, %64 : vector<16x128xf32>
    %66 = vector.broadcast %2 : vector<1x128xf32> to vector<16x128xf32>
    %67 = arith.addf %65, %66 : vector<16x128xf32>
    %cst_49 = arith.constant 0.000000e+00 : f32
    %68 = vector.broadcast %cst_49 : f32 to vector<16x128xf32>
    %69 = arith.maximumf %67, %68 : vector<16x128xf32>
    %70 = arith.truncf %69 : vector<16x128xf32> to vector<16x128xbf16>
    %c0_50 = arith.constant 0 : index
    %c0_51 = arith.constant 0 : index
    %c0_52 = arith.constant 0 : index
    %71 = vector.load %arg4[%c0_50, %c0_51, %c0_52] : memref<3x128x128xbf16, #tpu.memory_space<vmem>>, vector<1x128x128xbf16>
    %72 = vector.shape_cast %71 : vector<1x128x128xbf16> to vector<128x128xbf16>
    %cst_53 = arith.constant dense<0.000000e+00> : vector<16x128xf32>
    %73 = tpu.matmul %70, %72, %cst_53 {dimension_numbers = #tpu.dot_dimension_numbers<[1], [0], [0], [1], [0, 0, 1, 1], [], []>} : vector<16x128xbf16>, vector<128x128xbf16>, vector<16x128xf32> -> vector<16x128xf32>
    %c1_54 = arith.constant 1 : index
    %c0_55 = arith.constant 0 : index
    %c0_56 = arith.constant 0 : index
    %74 = vector.load %arg4[%c1_54, %c0_55, %c0_56] : memref<3x128x128xbf16, #tpu.memory_space<vmem>>, vector<1x128x128xbf16>
    %75 = vector.shape_cast %74 : vector<1x128x128xbf16> to vector<128x128xbf16>
    %cst_57 = arith.constant dense<0.000000e+00> : vector<16x128xf32>
    %76 = tpu.matmul %70, %75, %cst_57 {dimension_numbers = #tpu.dot_dimension_numbers<[1], [0], [0], [1], [0, 0, 1, 1], [], []>} : vector<16x128xbf16>, vector<128x128xbf16>, vector<16x128xf32> -> vector<16x128xf32>
    %c2_58 = arith.constant 2 : index
    %c0_59 = arith.constant 0 : index
    %c0_60 = arith.constant 0 : index
    %77 = vector.load %arg4[%c2_58, %c0_59, %c0_60] : memref<3x128x128xbf16, #tpu.memory_space<vmem>>, vector<1x128x128xbf16>
    %78 = vector.shape_cast %77 : vector<1x128x128xbf16> to vector<128x128xbf16>
    %cst_61 = arith.constant dense<0.000000e+00> : vector<16x128xf32>
    %79 = tpu.matmul %70, %78, %cst_61 {dimension_numbers = #tpu.dot_dimension_numbers<[1], [0], [0], [1], [0, 0, 1, 1], [], []>} : vector<16x128xbf16>, vector<128x128xbf16>, vector<16x128xf32> -> vector<16x128xf32>
    %80 = vector.extract_strided_slice %73 {offsets = [0, 0], sizes = [15, 128], strides = [1, 1]} : vector<16x128xf32> to vector<15x128xf32>
    %81 = tpu.concatenate %1, %80 in 0 : vector<1x128xf32>, vector<15x128xf32> -> vector<16x128xf32>
    %82 = arith.addf %76, %81 : vector<16x128xf32>
    %83 = vector.extract_strided_slice %79 {offsets = [1, 0], sizes = [15, 128], strides = [1, 1]} : vector<16x128xf32> to vector<15x128xf32>
    %84 = tpu.concatenate %83, %1 in 0 : vector<15x128xf32>, vector<1x128xf32> -> vector<16x128xf32>
    %85 = arith.addf %82, %84 : vector<16x128xf32>
    %86 = vector.broadcast %3 : vector<1x128xf32> to vector<16x128xf32>
    %87 = arith.addf %85, %86 : vector<16x128xf32>
    %cst_62 = arith.constant 0.000000e+00 : f32
    %88 = vector.broadcast %cst_62 : f32 to vector<16x128xf32>
    %89 = arith.maximumf %87, %88 : vector<16x128xf32>
    %90 = arith.truncf %89 : vector<16x128xf32> to vector<16x128xbf16>
    %c1_63 = arith.constant 1 : index
    %c0_64 = arith.constant 0 : index
    %c0_65 = arith.constant 0 : index
    %91 = vector.load %arg6[%c1_63, %c0_64, %c0_65] : memref<2x16x128xbf16, #tpu.memory_space<vmem>>, vector<1x16x128xbf16>
    %92 = vector.shape_cast %91 : vector<1x16x128xbf16> to vector<16x128xbf16>
    %93 = vector.shape_cast %90 : vector<16x128xbf16> to vector<1x16x128xbf16>
    tpu.vector_store %arg6[%c1_63, %c0_64, %c0_65], %93 {strides = array<i32>} : memref<2x16x128xbf16, #tpu.memory_space<vmem>>, vector<1x16x128xbf16>,
    return
  }
  func.func @transform_0(%arg0: i32) -> (i32, i32, i32) {
    %c0_i32 = arith.constant 0 : i32
    %c0_i32_0 = arith.constant 0 : i32
    %c0_i32_1 = arith.constant 0 : i32
    %c0_i32_2 = arith.constant 0 : i32
    return %c0_i32, %c0_i32_0, %c0_i32_1 : i32, i32, i32
  }
  func.func @transform_1(%arg0: i32) -> (i32, i32, i32) {
    %c0_i32 = arith.constant 0 : i32
    %c0_i32_0 = arith.constant 0 : i32
    %c0_i32_1 = arith.constant 0 : i32
    %c0_i32_2 = arith.constant 0 : i32
    return %c0_i32, %c0_i32_0, %c0_i32_1 : i32, i32, i32
  }
  func.func @transform_2(%arg0: i32) -> (i32, i32) {
    %c0_i32 = arith.constant 0 : i32
    %c0_i32_0 = arith.constant 0 : i32
    %c0_i32_1 = arith.constant 0 : i32
    return %c0_i32, %c0_i32_0 : i32, i32
  }
  func.func @transform_3(%arg0: i32) -> (i32, i32, i32) {
    %c0_i32 = arith.constant 0 : i32
    %c0_i32_0 = arith.constant 0 : i32
    %c0_i32_1 = arith.constant 0 : i32
    %c0_i32_2 = arith.constant 0 : i32
    return %c0_i32, %c0_i32_0, %c0_i32_1 : i32, i32, i32
  }
  func.func @transform_4(%arg0: i32) -> (i32, i32) {
    %c0_i32 = arith.constant 0 : i32
    %c0_i32_0 = arith.constant 0 : i32
    %c0_i32_1 = arith.constant 0 : i32
    return %c0_i32, %c0_i32_0 : i32, i32
  }
  func.func @transform_5(%arg0: i32) -> (i32, i32, i32) {
    %c0_i32 = arith.constant 0 : i32
    %c0_i32_0 = arith.constant 0 : i32
    %c0_i32_1 = arith.constant 0 : i32
    %c0_i32_2 = arith.constant 0 : i32
    return %c0_i32, %c0_i32_0, %c0_i32_1 : i32, i32, i32
  }
}

</mosaic_0001>

<llo_original>
// kernel: tpu_custom_call.1
$region0: #{tpu_custom_call.1}
  #allocation0 [shape = 'u32[]', space=smem, size = 0x4, offset = 0x4, fixed_abs, tag = 'smem constant byte address 0x4 - core index']
  #allocation1 [shape = 'u32[72,128]{1,0:T(1,128)}', space=vmem, size = 0x9000, scoped, tag = 'internal scratch']
  %s0 = inlined_call_operand.hbm [shape: bf16[2,16,64], index: 0, kind: input, shape index: {}]
  %s1 = inlined_call_operand.hbm [shape: bf16[3,64,128], index: 1, kind: input, shape index: {}]
  %s2 = inlined_call_operand.vmem [shape: f32[1,128], index: 2, kind: input, shape index: {}]
  %s3 = inlined_call_operand.hbm [shape: bf16[3,128,128], index: 3, kind: input, shape index: {}]
  %s4 = inlined_call_operand.vmem [shape: f32[1,128], index: 4, kind: input, shape index: {}]
  %s5 = inlined_call_operand.hbm [shape: bf16[2,16,128], index: 5, kind: output, shape index: {}]
  %s6 = sld [smem:[#allocation0]]
  $region42: #{tpu_custom_call.1} parent=0
    _
  %s8 = ssub.s32 1, %s6
  %s9 = scalar_select 0, %s8, %s6
  $region1: #{tpu_custom_call.1} parent=0
    #allocation2 [shape = 'u8[8192]{0}', space=vmem, size = 0x2000, scoped, tag = 'input window, operand 0, single buffered']
    #allocation3 [shape = 's32[1]{0}', space=sflag, size = 0x4, scoped, tag = 'scoped memory for tpu_custom_call.1']
    #allocation4 [shape = 's32[1]{0}', space=sflag, size = 0x4, scoped, tag = 'scoped memory for tpu_custom_call.1']
    #allocation5 [shape = 'u8[49152]{0}', space=vmem, size = 0xc000, scoped, tag = 'input window, operand 1, single buffered']
    #allocation6 [shape = 's32[1]{0}', space=sflag, size = 0x4, scoped, tag = 'scoped memory for tpu_custom_call.1']
    #allocation7 [shape = 'u8[98304]{0}', space=vmem, size = 0x18000, scoped, tag = 'input window, operand 3, single buffered']
    #allocation8 [shape = 'u8[8192]{0}', space=vmem, size = 0x2000, scoped, tag = 'output window, operand 0, single buffered']
    %10 = vsyncpa [#allocation3], 0
    %11 = vsyncpa [#allocation6], 0
    %12 = vsyncpa [#allocation4], 0
    // Predicated region
    $region2: #{tpu_custom_call.1} parent=1 // pred_check
      _
    $region3: #{tpu_custom_call.1} parent=1 // pred_check_branch
      %14 = sbr.rel (0) target = $region5
    $region4: #{tpu_custom_call.1} parent=1 // pred_region
      %16 = vsyncadd [#allocation3], 0
      %s17 = sshll.u32 %s0, 4
      %s18 = int_to_ptr.hbm [resolvable:$true] %s17
      %s19 = sshll.u32 [#allocation2], 4
      %s20 = int_to_ptr.vmem [resolvable:$true] %s19
      %25 = dma.hbm_to_vmem [thread:$0]  %s18, 256, %s20, [#allocation3], 64, 64, 4
    $region5: #{tpu_custom_call.1} parent=1 // pred_fallthru
      _
    // Predicated region
    $region6: #{tpu_custom_call.1} parent=1 // pred_check
      _
    $region7: #{tpu_custom_call.1} parent=1 // pred_check_branch
      %27 = sbr.rel (0) target = $region9
    $region8: #{tpu_custom_call.1} parent=1 // pred_region
      %29 = vsyncadd [#allocation6], 0
      %s30 = sshll.u32 %s1, 4
      %s31 = int_to_ptr.hbm [resolvable:$true] %s30
      %s32 = sshll.u32 [#allocation5], 4
      %s33 = int_to_ptr.vmem [resolvable:$true] %s32
      %38 = dma.hbm_to_vmem [thread:$0]  %s31, 1536, %s33, [#allocation6], 64, 64, 4
    $region9: #{tpu_custom_call.1} parent=1 // pred_fallthru
      _
    // Predicated region
    $region10: #{tpu_custom_call.1} parent=1 // pred_check
      _
    $region11: #{tpu_custom_call.1} parent=1 // pred_check_branch
      %40 = sbr.rel (0) target = $region13
    $region12: #{tpu_custom_call.1} parent=1 // pred_region
      _
    $region13: #{tpu_custom_call.1} parent=1 // pred_fallthru
      _
    // Predicated region
    $region14: #{tpu_custom_call.1} parent=1 // pred_check
      _
    $region15: #{tpu_custom_call.1} parent=1 // pred_check_branch
      %42 = sbr.rel (0) target = $region17
    $region16: #{tpu_custom_call.1} parent=1 // pred_region
      %44 = vsyncadd [#allocation6], 0
      %s45 = sshll.u32 %s3, 4
      %s46 = int_to_ptr.hbm [resolvable:$true] %s45
      %s47 = sshll.u32 [#allocation7], 4
      %s48 = int_to_ptr.vmem [resolvable:$true] %s47
      %53 = dma.hbm_to_vmem [thread:$0]  %s46, 3072, %s48, [#allocation6], 64, 64, 4
    $region17: #{tpu_custom_call.1} parent=1 // pred_fallthru
      _
    // Predicated region
    $region18: #{tpu_custom_call.1} parent=1 // pred_check
      _
    $region19: #{tpu_custom_call.1} parent=1 // pred_check_branch
      %55 = sbr.rel (0) target = $region21
    $region20: #{tpu_custom_call.1} parent=1 // pred_region
      _
    $region21: #{tpu_custom_call.1} parent=1 // pred_fallthru
      _
    // Predicated region
    $region22: #{tpu_custom_call.1} parent=1 // pred_check
      _
    $region23: #{tpu_custom_call.1} parent=1 // pred_check_branch
      %57 = sbr.rel (0) target = $region25
    $region24: #{tpu_custom_call.1} parent=1 // pred_region
      %59 = dma.done [#allocation3], 256
    $region25: #{tpu_custom_call.1} parent=1 // pred_fallthru
      _
    // Predicated region
    $region26: #{tpu_custom_call.1} parent=1 // pred_check
      _
    $region27: #{tpu_custom_call.1} parent=1 // pred_check_branch
      %61 = sbr.rel (0) target = $region29
    $region28: #{tpu_custom_call.1} parent=1 // pred_region
      %63 = dma.done [#allocation6], 1536
    $region29: #{tpu_custom_call.1} parent=1 // pred_fallthru
      _
    // Predicated region
    $region30: #{tpu_custom_call.1} parent=1 // pred_check
      _
    $region31: #{tpu_custom_call.1} parent=1 // pred_check_branch
      %65 = sbr.rel (0) target = $region33
    $region32: #{tpu_custom_call.1} parent=1 // pred_region
      %67 = dma.done [#allocation6], 3072
    $region33: #{tpu_custom_call.1} parent=1 // pred_fallthru
      _
    %v69 = vld [vmem:[%s2] sm:$0x1]
    %v70 = vld [vmem:[%s4] sm:$0x1]
    %v71 = vld [vmem:[#allocation2] sm:$0xf]
    %v72 = vld [vmem:[#allocation2 + $0x4] sm:$0xf]
    %v73 = vld [vmem:[#allocation5] sm:$0xf]
    %v74 = vld [vmem:[#allocation5 + $0x4] sm:$0xf]
    %v75 = vld [vmem:[#allocation5 + $0x8] sm:$0xf]
    %v76 = vld [vmem:[#allocation5 + $0xc] sm:$0xf]
    %v77 = vld [vmem:[#allocation5 + $0x10] sm:$0xf]
    %v78 = vld [vmem:[#allocation5 + $0x14] sm:$0xf]
    %v79 = vld [vmem:[#allocation5 + $0x18] sm:$0xf]
    %v80 = vld [vmem:[#allocation5 + $0x1c] sm:$0xf]
    %v83 = vunpack.c.l.b16 %v71
    %v84 = vunpack.c.l.b16 %v72
    %v85 = vpack.c.b16 %v84, %v83
    %v94 = vunpack.c.l.b16 %v73
    %v95 = vunpack.c.l.b16 %v74
    %v96 = vunpack.c.l.b16 %v75
    %v97 = vunpack.c.l.b16 %v76
    %v98 = vunpack.c.l.b16 %v77
    %v99 = vunpack.c.l.b16 %v78
    %v100 = vunpack.c.l.b16 %v79
    %v101 = vunpack.c.l.b16 %v80
    %v102 = vpack.c.b16 %v95, %v94
    %v103 = vpack.c.b16 %v97, %v96
    %v104 = vpack.c.b16 %v99, %v98
    %v105 = vpack.c.b16 %v101, %v100
    %vm110 = vcmask 523264
    %v112 = vsel %vm110, %v85, 0
    %114 = vmatpush.bf16.msra.mxu0 0
    %115 = vmatpush.bf16.msra.mxu0 0
    %116 = vmatpush.bf16.msra.mxu0 0
    %117 = vmatpush.bf16.msra.mxu0 0
    %118 = vmatpush.bf16.msra.mxu0 %v105
    %119 = vmatpush.bf16.msra.mxu0 %v104
    %120 = vmatpush.bf16.msra.mxu0 %v103
    %121 = vmatpush.bf16.msra.mxu0 %v102
    %122 = vmatmul.bf16.gmra.mxu0 %v112
    %v123 = vpop.f32.mrf.mxu0
    %v124 = vadd.f32 0.0, %v123
    %v125 = vpop.f32.mrf.mxu0
    %v126 = vadd.f32 0.0, %v125
    %127 = vdwg.mxu0
    %s128 = scalar_lea.vmem [#allocation5], 32
    %v129 = vld [vmem:[%s128] sm:$0xf]
    %v130 = vld [vmem:[%s128 + $0x4] sm:$0xf]
    %v131 = vld [vmem:[%s128 + $0x8] sm:$0xf]
    %v132 = vld [vmem:[%s128 + $0xc] sm:$0xf]
    %v133 = vld [vmem:[%s128 + $0x10] sm:$0xf]
    %v134 = vld [vmem:[%s128 + $0x14] sm:$0xf]
    %v135 = vld [vmem:[%s128 + $0x18] sm:$0xf]
    %v136 = vld [vmem:[%s128 + $0x1c] sm:$0xf]
    %s137 = scalar_lea.vmem [#allocation5], 64
    %v138 = vld [vmem:[%s137] sm:$0xf]
    %v139 = vld [vmem:[%s137 + $0x4] sm:$0xf]
    %v140 = vld [vmem:[%s137 + $0x8] sm:$0xf]
    %v141 = vld [vmem:[%s137 + $0xc] sm:$0xf]
    %v142 = vld [vmem:[%s137 + $0x10] sm:$0xf]
    %v143 = vld [vmem:[%s137 + $0x14] sm:$0xf]
    %v144 = vld [vmem:[%s137 + $0x18] sm:$0xf]
    %v145 = vld [vmem:[%s137 + $0x1c] sm:$0xf]
    %v154 = vunpack.c.l.b16 %v138
    %v155 = vunpack.c.l.b16 %v139
    %v156 = vunpack.c.l.b16 %v140
    %v157 = vunpack.c.l.b16 %v141
    %v158 = vunpack.c.l.b16 %v142
    %v159 = vunpack.c.l.b16 %v143
    %v160 = vunpack.c.l.b16 %v144
    %v161 = vunpack.c.l.b16 %v145
    %v162 = vpack.c.b16 %v155, %v154
    %v163 = vpack.c.b16 %v157, %v156
    %v164 = vpack.c.b16 %v159, %v158
    %v165 = vpack.c.b16 %v161, %v160
    %170 = vmatpush.bf16.msra.mxu0 0
    %171 = vmatpush.bf16.msra.mxu0 0
    %172 = vmatpush.bf16.msra.mxu0 0
    %173 = vmatpush.bf16.msra.mxu0 0
    %174 = vmatpush.bf16.msra.mxu0 %v165
    %175 = vmatpush.bf16.msra.mxu0 %v164
    %176 = vmatpush.bf16.msra.mxu0 %v163
    %177 = vmatpush.bf16.msra.mxu0 %v162
    %178 = vmatmul.bf16.gmra.mxu0 %v112
    %v179 = vpop.f32.mrf.mxu0
    %v180 = vadd.f32 0.0, %v179
    %v181 = vpop.f32.mrf.mxu0
    %v182 = vadd.f32 0.0, %v181
    %183 = vdwg.mxu0
    %vm186 = vcmask 1040384
    %v187 = vrot.slane %v124, 7
    %v188 = vrot.slane %v126, 7
    %v189 = vsel %vm186, %v187, %v188
    %v192 = vsel %vm186, 0.0, %v187
    %v201 = vunpack.c.l.b16 %v129
    %v202 = vunpack.c.l.b16 %v130
    %v203 = vunpack.c.l.b16 %v131
    %v204 = vunpack.c.l.b16 %v132
    %v205 = vunpack.c.l.b16 %v133
    %v206 = vunpack.c.l.b16 %v134
    %v207 = vunpack.c.l.b16 %v135
    %v208 = vunpack.c.l.b16 %v136
    %v209 = vpack.c.b16 %v202, %v201
    %v210 = vpack.c.b16 %v204, %v203
    %v211 = vpack.c.b16 %v206, %v205
    %v212 = vpack.c.b16 %v208, %v207
    %217 = vmatpush.bf16.msra.mxu0 0
    %218 = vmatpush.bf16.msra.mxu0 0
    %219 = vmatpush.bf16.msra.mxu0 0
    %220 = vmatpush.bf16.msra.mxu0 0
    %221 = vmatpush.bf16.msra.mxu0 %v212
    %222 = vmatpush.bf16.msra.mxu0 %v211
    %223 = vmatpush.bf16.msra.mxu0 %v210
    %224 = vmatpush.bf16.msra.mxu0 %v209
    %225 = vmatmul.bf16.gmra.mxu0 %v112
    %v226 = vpop.f32.mrf.mxu0
    %v227 = vadd.f32 %v192, %v226
    %v228 = vpop.f32.mrf.mxu0
    %v229 = vadd.f32 %v189, %v228
    %230 = vdwg.mxu0
    %vm233 = vcmask 1046528
    %v234 = vrot.slane %v180, 1
    %v235 = vrot.slane %v182, 1
    %v236 = vsel %vm233, %v234, %v235
    %v239 = vsel %vm233, %v235, 0.0
    %v240 = vadd.f32 %v227, %v236
    %v241 = vadd.f32 %v229, %v239
    %v243 = vperm.slane %v69, 0
    %v245 = vadd.f32 %v240, %v243
    %v246 = vadd.f32 %v241, %v243
    %v247 = vmax.f32 %v245, 0.0
    %v248 = vmax.f32 %v246, 0.0
    %v249 = vpack.c.bf16 %v248, %v247
    %v250 = vld [vmem:[#allocation7] sm:$0xf]
    %v251 = vld [vmem:[#allocation7 + $0x4] sm:$0xf]
    %v252 = vld [vmem:[#allocation7 + $0x8] sm:$0xf]
    %v253 = vld [vmem:[#allocation7 + $0xc] sm:$0xf]
    %v254 = vld [vmem:[#allocation7 + $0x10] sm:$0xf]
    %v255 = vld [vmem:[#allocation7 + $0x14] sm:$0xf]
    %v256 = vld [vmem:[#allocation7 + $0x18] sm:$0xf]
    %v257 = vld [vmem:[#allocation7 + $0x1c] sm:$0xf]
    %v258 = vld [vmem:[#allocation7 + $0x20] sm:$0xf]
    %v259 = vld [vmem:[#allocation7 + $0x24] sm:$0xf]
    %v260 = vld [vmem:[#allocation7 + $0x28] sm:$0xf]
    %v261 = vld [vmem:[#allocation7 + $0x2c] sm:$0xf]
    %v262 = vld [vmem:[#allocation7 + $0x30] sm:$0xf]
    %v263 = vld [vmem:[#allocation7 + $0x34] sm:$0xf]
    %v264 = vld [vmem:[#allocation7 + $0x38] sm:$0xf]
    %v265 = vld [vmem:[#allocation7 + $0x3c] sm:$0xf]
    %v282 = vunpack.c.l.b16 %v250
    %v283 = vunpack.c.l.b16 %v251
    %v284 = vunpack.c.l.b16 %v252
    %v285 = vunpack.c.l.b16 %v253
    %v286 = vunpack.c.l.b16 %v254
    %v287 = vunpack.c.l.b16 %v255
    %v288 = vunpack.c.l.b16 %v256
    %v289 = vunpack.c.l.b16 %v257
    %v290 = vunpack.c.l.b16 %v258
    %v291 = vunpack.c.l.b16 %v259
    %v292 = vunpack.c.l.b16 %v260
    %v293 = vunpack.c.l.b16 %v261
    %v294 = vunpack.c.l.b16 %v262
    %v295 = vunpack.c.l.b16 %v263
    %v296 = vunpack.c.l.b16 %v264
    %v297 = vunpack.c.l.b16 %v265
    %v298 = vpack.c.b16 %v283, %v282
    %v299 = vpack.c.b16 %v285, %v284
    %v300 = vpack.c.b16 %v287, %v286
    %v301 = vpack.c.b16 %v289, %v288
    %v302 = vpack.c.b16 %v291, %v290
    %v303 = vpack.c.b16 %v293, %v292
    %v304 = vpack.c.b16 %v295, %v294
    %v305 = vpack.c.b16 %v297, %v296
    %314 = vmatpush.bf16.msra.mxu0 %v305
    %315 = vmatpush.bf16.msra.mxu0 %v304
    %316 = vmatpush.bf16.msra.mxu0 %v303
    %317 = vmatpush.bf16.msra.mxu0 %v302
    %318 = vmatpush.bf16.msra.mxu0 %v301
    %319 = vmatpush.bf16.msra.mxu0 %v300
    %320 = vmatpush.bf16.msra.mxu0 %v299
    %321 = vmatpush.bf16.msra.mxu0 %v298
    %322 = vmatmul.bf16.gmra.mxu0 %v249
    %v323 = vpop.f32.mrf.mxu0
    %v324 = vadd.f32 0.0, %v323
    %v325 = vpop.f32.mrf.mxu0
    %v326 = vadd.f32 0.0, %v325
    %327 = vdwg.mxu0
    %s328 = scalar_lea.vmem [#allocation7], 64
    %v329 = vld [vmem:[%s328] sm:$0xf]
    %v330 = vld [vmem:[%s328 + $0x4] sm:$0xf]
    %v331 = vld [vmem:[%s328 + $0x8] sm:$0xf]
    %v332 = vld [vmem:[%s328 + $0xc] sm:$0xf]
    %v333 = vld [vmem:[%s328 + $0x10] sm:$0xf]
    %v334 = vld [vmem:[%s328 + $0x14] sm:$0xf]
    %v335 = vld [vmem:[%s328 + $0x18] sm:$0xf]
    %v336 = vld [vmem:[%s328 + $0x1c] sm:$0xf]
    %v337 = vld [vmem:[%s328 + $0x20] sm:$0xf]
    %v338 = vld [vmem:[%s328 + $0x24] sm:$0xf]
    %v339 = vld [vmem:[%s328 + $0x28] sm:$0xf]
    %v340 = vld [vmem:[%s328 + $0x2c] sm:$0xf]
    %v341 = vld [vmem:[%s328 + $0x30] sm:$0xf]
    %v342 = vld [vmem:[%s328 + $0x34] sm:$0xf]
    %v343 = vld [vmem:[%s328 + $0x38] sm:$0xf]
    %v344 = vld [vmem:[%s328 + $0x3c] sm:$0xf]
    %s345 = scalar_lea.vmem [#allocation7], 128
    %v346 = vld [vmem:[%s345] sm:$0xf]
    %v347 = vld [vmem:[%s345 + $0x4] sm:$0xf]
    %v348 = vld [vmem:[%s345 + $0x8] sm:$0xf]
    %v349 = vld [vmem:[%s345 + $0xc] sm:$0xf]
    %v350 = vld [vmem:[%s345 + $0x10] sm:$0xf]
    %v351 = vld [vmem:[%s345 + $0x14] sm:$0xf]
    %v352 = vld [vmem:[%s345 + $0x18] sm:$0xf]
    %v353 = vld [vmem:[%s345 + $0x1c] sm:$0xf]
    %v354 = vld [vmem:[%s345 + $0x20] sm:$0xf]
    %v355 = vld [vmem:[%s345 + $0x24] sm:$0xf]
    %v356 = vld [vmem:[%s345 + $0x28] sm:$0xf]
    %v357 = vld [vmem:[%s345 + $0x2c] sm:$0xf]
    %v358 = vld [vmem:[%s345 + $0x30] sm:$0xf]
    %v359 = vld [vmem:[%s345 + $0x34] sm:$0xf]
    %v360 = vld [vmem:[%s345 + $0x38] sm:$0xf]
    %v361 = vld [vmem:[%s345 + $0x3c] sm:$0xf]
    %v378 = vunpack.c.l.b16 %v346
    %v379 = vunpack.c.l.b16 %v347
    %v380 = vunpack.c.l.b16 %v348
    %v381 = vunpack.c.l.b16 %v349
    %v382 = vunpack.c.l.b16 %v350
    %v383 = vunpack.c.l.b16 %v351
    %v384 = vunpack.c.l.b16 %v352
    %v385 = vunpack.c.l.b16 %v353
    %v386 = vunpack.c.l.b16 %v354
    %v387 = vunpack.c.l.b16 %v355
    %v388 = vunpack.c.l.b16 %v356
    %v389 = vunpack.c.l.b16 %v357
    %v390 = vunpack.c.l.b16 %v358
    %v391 = vunpack.c.l.b16 %v359
    %v392 = vunpack.c.l.b16 %v360
    %v393 = vunpack.c.l.b16 %v361
    %v394 = vpack.c.b16 %v379, %v378
    %v395 = vpack.c.b16 %v381, %v380
    %v396 = vpack.c.b16 %v383, %v382
    %v397 = vpack.c.b16 %v385, %v384
    %v398 = vpack.c.b16 %v387, %v386
    %v399 = vpack.c.b16 %v389, %v388
    %v400 = vpack.c.b16 %v391, %v390
    %v401 = vpack.c.b16 %v393, %v392
    %410 = vmatpush.bf16.msra.mxu0 %v401
    %411 = vmatpush.bf16.msra.mxu0 %v400
    %412 = vmatpush.bf16.msra.mxu0 %v399
    %413 = vmatpush.bf16.msra.mxu0 %v398
    %414 = vmatpush.bf16.msra.mxu0 %v397
    %415 = vmatpush.bf16.msra.mxu0 %v396
    %416 = vmatpush.bf16.msra.mxu0 %v395
    %417 = vmatpush.bf16.msra.mxu0 %v394
    %418 = vmatmul.bf16.gmra.mxu0 %v249
    %v419 = vpop.f32.mrf.mxu0
    %v420 = vadd.f32 0.0, %v419
    %v421 = vpop.f32.mrf.mxu0
    %v422 = vadd.f32 0.0, %v421
    %423 = vdwg.mxu0
    %v426 = vrot.slane %v324, 7
    %v427 = vrot.slane %v326, 7
    %v428 = vsel %vm186, %v426, %v427
    %v431 = vsel %vm186, 0.0, %v426
    %v448 = vunpack.c.l.b16 %v329
    %v449 = vunpack.c.l.b16 %v330
    %v450 = vunpack.c.l.b16 %v331
    %v451 = vunpack.c.l.b16 %v332
    %v452 = vunpack.c.l.b16 %v333
    %v453 = vunpack.c.l.b16 %v334
    %v454 = vunpack.c.l.b16 %v335
    %v455 = vunpack.c.l.b16 %v336
    %v456 = vunpack.c.l.b16 %v337
    %v457 = vunpack.c.l.b16 %v338
    %v458 = vunpack.c.l.b16 %v339
    %v459 = vunpack.c.l.b16 %v340
    %v460 = vunpack.c.l.b16 %v341
    %v461 = vunpack.c.l.b16 %v342
    %v462 = vunpack.c.l.b16 %v343
    %v463 = vunpack.c.l.b16 %v344
    %v464 = vpack.c.b16 %v449, %v448
    %v465 = vpack.c.b16 %v451, %v450
    %v466 = vpack.c.b16 %v453, %v452
    %v467 = vpack.c.b16 %v455, %v454
    %v468 = vpack.c.b16 %v457, %v456
    %v469 = vpack.c.b16 %v459, %v458
    %v470 = vpack.c.b16 %v461, %v460
    %v471 = vpack.c.b16 %v463, %v462
    %480 = vmatpush.bf16.msra.mxu0 %v471
    %481 = vmatpush.bf16.msra.mxu0 %v470
    %482 = vmatpush.bf16.msra.mxu0 %v469
    %483 = vmatpush.bf16.msra.mxu0 %v468
    %484 = vmatpush.bf16.msra.mxu0 %v467
    %485 = vmatpush.bf16.msra.mxu0 %v466
    %486 = vmatpush.bf16.msra.mxu0 %v465
    %487 = vmatpush.bf16.msra.mxu0 %v464
    %488 = vmatmul.bf16.gmra.mxu0 %v249
    %v489 = vpop.f32.mrf.mxu0
    %v490 = vadd.f32 %v431, %v489
    %v491 = vpop.f32.mrf.mxu0
    %v492 = vadd.f32 %v428, %v491
    %493 = vdwg.mxu0
    %v496 = vrot.slane %v420, 1
    %v497 = vrot.slane %v422, 1
    %v498 = vsel %vm233, %v496, %v497
    %v501 = vsel %vm233, %v497, 0.0
    %v502 = vadd.f32 %v490, %v498
    %v503 = vadd.f32 %v492, %v501
    %v505 = vperm.slane %v70, 0
    %v507 = vadd.f32 %v502, %v505
    %v508 = vadd.f32 %v503, %v505
    %v509 = vmax.f32 %v507, 0.0
    %v510 = vmax.f32 %v508, 0.0
    %v511 = vpack.c.bf16 %v509, %v509
    %v512 = vpack.c.bf16 %v510, %v510
    %513 = vst [vmem:[#allocation8] sm:$0xf] %v511
    %514 = vst [vmem:[#allocation8 + $0x4] sm:$0xf] %v512
    %s515 = scalar_lea.vmem [#allocation2], 8
    %v516 = vld [vmem:[%s515] sm:$0xf]
    %v517 = vld [vmem:[%s515 + $0x4] sm:$0xf]
    %v518 = vld [vmem:[#allocation5] sm:$0xf]
    %v519 = vld [vmem:[#allocation5 + $0x4] sm:$0xf]
    %v520 = vld [vmem:[#allocation5 + $0x8] sm:$0xf]
    %v521 = vld [vmem:[#allocation5 + $0xc] sm:$0xf]
    %v522 = vld [vmem:[#allocation5 + $0x10] sm:$0xf]
    %v523 = vld [vmem:[#allocation5 + $0x14] sm:$0xf]
    %v524 = vld [vmem:[#allocation5 + $0x18] sm:$0xf]
    %v525 = vld [vmem:[#allocation5 + $0x1c] sm:$0xf]
    %v528 = vunpack.c.l.b16 %v516
    %v529 = vunpack.c.l.b16 %v517
    %v530 = vpack.c.b16 %v529, %v528
    %v539 = vunpack.c.l.b16 %v518
    %v540 = vunpack.c.l.b16 %v519
    %v541 = vunpack.c.l.b16 %v520
    %v542 = vunpack.c.l.b16 %v521
    %v543 = vunpack.c.l.b16 %v522
    %v544 = vunpack.c.l.b16 %v523
    %v545 = vunpack.c.l.b16 %v524
    %v546 = vunpack.c.l.b16 %v525
    %v547 = vpack.c.b16 %v540, %v539
    %v548 = vpack.c.b16 %v542, %v541
    %v549 = vpack.c.b16 %v544, %v543
    %v550 = vpack.c.b16 %v546, %v545
    %v556 = vsel %vm110, %v530, 0
    %558 = vmatpush.bf16.msra.mxu0 0
    %559 = vmatpush.bf16.msra.mxu0 0
    %560 = vmatpush.bf16.msra.mxu0 0
    %561 = vmatpush.bf16.msra.mxu0 0
    %562 = vmatpush.bf16.msra.mxu0 %v550
    %563 = vmatpush.bf16.msra.mxu0 %v549
    %564 = vmatpush.bf16.msra.mxu0 %v548
    %565 = vmatpush.bf16.msra.mxu0 %v547
    %566 = vmatmul.bf16.gmra.mxu0 %v556
    %v567 = vpop.f32.mrf.mxu0
    %v568 = vadd.f32 0.0, %v567
    %v569 = vpop.f32.mrf.mxu0
    %v570 = vadd.f32 0.0, %v569
    %571 = vdwg.mxu0
    %v572 = vld [vmem:[%s128] sm:$0xf]
    %v573 = vld [vmem:[%s128 + $0x4] sm:$0xf]
    %v574 = vld [vmem:[%s128 + $0x8] sm:$0xf]
    %v575 = vld [vmem:[%s128 + $0xc] sm:$0xf]
    %v576 = vld [vmem:[%s128 + $0x10] sm:$0xf]
    %v577 = vld [vmem:[%s128 + $0x14] sm:$0xf]
    %v578 = vld [vmem:[%s128 + $0x18] sm:$0xf]
    %v579 = vld [vmem:[%s128 + $0x1c] sm:$0xf]
    %v580 = vld [vmem:[%s137] sm:$0xf]
    %v581 = vld [vmem:[%s137 + $0x4] sm:$0xf]
    %v582 = vld [vmem:[%s137 + $0x8] sm:$0xf]
    %v583 = vld [vmem:[%s137 + $0xc] sm:$0xf]
    %v584 = vld [vmem:[%s137 + $0x10] sm:$0xf]
    %v585 = vld [vmem:[%s137 + $0x14] sm:$0xf]
    %v586 = vld [vmem:[%s137 + $0x18] sm:$0xf]
    %v587 = vld [vmem:[%s137 + $0x1c] sm:$0xf]
    %v596 = vunpack.c.l.b16 %v580
    %v597 = vunpack.c.l.b16 %v581
    %v598 = vunpack.c.l.b16 %v582
    %v599 = vunpack.c.l.b16 %v583
    %v600 = vunpack.c.l.b16 %v584
    %v601 = vunpack.c.l.b16 %v585
    %v602 = vunpack.c.l.b16 %v586
    %v603 = vunpack.c.l.b16 %v587
    %v604 = vpack.c.b16 %v597, %v596
    %v605 = vpack.c.b16 %v599, %v598
    %v606 = vpack.c.b16 %v601, %v600
    %v607 = vpack.c.b16 %v603, %v602
    %612 = vmatpush.bf16.msra.mxu0 0
    %613 = vmatpush.bf16.msra.mxu0 0
    %614 = vmatpush.bf16.msra.mxu0 0
    %615 = vmatpush.bf16.msra.mxu0 0
    %616 = vmatpush.bf16.msra.mxu0 %v607
    %617 = vmatpush.bf16.msra.mxu0 %v606
    %618 = vmatpush.bf16.msra.mxu0 %v605
    %619 = vmatpush.bf16.msra.mxu0 %v604
    %620 = vmatmul.bf16.gmra.mxu0 %v556
    %v621 = vpop.f32.mrf.mxu0
    %v622 = vadd.f32 0.0, %v621
    %v623 = vpop.f32.mrf.mxu0
    %v624 = vadd.f32 0.0, %v623
    %625 = vdwg.mxu0
    %v628 = vrot.slane %v568, 7
    %v629 = vrot.slane %v570, 7
    %v630 = vsel %vm186, %v628, %v629
    %v633 = vsel %vm186, 0.0, %v628
    %v642 = vunpack.c.l.b16 %v572
    %v643 = vunpack.c.l.b16 %v573
    %v644 = vunpack.c.l.b16 %v574
    %v645 = vunpack.c.l.b16 %v575
    %v646 = vunpack.c.l.b16 %v576
    %v647 = vunpack.c.l.b16 %v577
    %v648 = vunpack.c.l.b16 %v578
    %v649 = vunpack.c.l.b16 %v579
    %v650 = vpack.c.b16 %v643, %v642
    %v651 = vpack.c.b16 %v645, %v644
    %v652 = vpack.c.b16 %v647, %v646
    %v653 = vpack.c.b16 %v649, %v648
    %658 = vmatpush.bf16.msra.mxu0 0
    %659 = vmatpush.bf16.msra.mxu0 0
    %660 = vmatpush.bf16.msra.mxu0 0
    %661 = vmatpush.bf16.msra.mxu0 0
    %662 = vmatpush.bf16.msra.mxu0 %v653
    %663 = vmatpush.bf16.msra.mxu0 %v652
    %664 = vmatpush.bf16.msra.mxu0 %v651
    %665 = vmatpush.bf16.msra.mxu0 %v650
    %666 = vmatmul.bf16.gmra.mxu0 %v556
    %v667 = vpop.f32.mrf.mxu0
    %v668 = vadd.f32 %v633, %v667
    %v669 = vpop.f32.mrf.mxu0
    %v670 = vadd.f32 %v630, %v669
    %671 = vdwg.mxu0
    %v674 = vrot.slane %v622, 1
    %v675 = vrot.slane %v624, 1
    %v676 = vsel %vm233, %v674, %v675
    %v679 = vsel %vm233, %v675, 0.0
    %v680 = vadd.f32 %v668, %v676
    %v681 = vadd.f32 %v670, %v679
    %v682 = vadd.f32 %v680, %v243
    %v683 = vadd.f32 %v681, %v243
    %v684 = vmax.f32 %v682, 0.0
    %v685 = vmax.f32 %v683, 0.0
    %v686 = vpack.c.bf16 %v685, %v684
    %v687 = vld [vmem:[#allocation7] sm:$0xf]
    %v688 = vld [vmem:[#allocation7 + $0x4] sm:$0xf]
    %v689 = vld [vmem:[#allocation7 + $0x8] sm:$0xf]
    %v690 = vld [vmem:[#allocation7 + $0xc] sm:$0xf]
    %v691 = vld [vmem:[#allocation7 + $0x10] sm:$0xf]
    %v692 = vld [vmem:[#allocation7 + $0x14] sm:$0xf]
    %v693 = vld [vmem:[#allocation7 + $0x18] sm:$0xf]
    %v694 = vld [vmem:[#allocation7 + $0x1c] sm:$0xf]
    %v695 = vld [vmem:[#allocation7 + $0x20] sm:$0xf]
    %v696 = vld [vmem:[#allocation7 + $0x24] sm:$0xf]
    %v697 = vld [vmem:[#allocation7 + $0x28] sm:$0xf]
    %v698 = vld [vmem:[#allocation7 + $0x2c] sm:$0xf]
    %v699 = vld [vmem:[#allocation7 + $0x30] sm:$0xf]
    %v700 = vld [vmem:[#allocation7 + $0x34] sm:$0xf]
    %v701 = vld [vmem:[#allocation7 + $0x38] sm:$0xf]
    %v702 = vld [vmem:[#allocation7 + $0x3c] sm:$0xf]
    %v719 = vunpack.c.l.b16 %v687
    %v720 = vunpack.c.l.b16 %v688
    %v721 = vunpack.c.l.b16 %v689
    %v722 = vunpack.c.l.b16 %v690
    %v723 = vunpack.c.l.b16 %v691
    %v724 = vunpack.c.l.b16 %v692
    %v725 = vunpack.c.l.b16 %v693
    %v726 = vunpack.c.l.b16 %v694
    %v727 = vunpack.c.l.b16 %v695
    %v728 = vunpack.c.l.b16 %v696
    %v729 = vunpack.c.l.b16 %v697
    %v730 = vunpack.c.l.b16 %v698
    %v731 = vunpack.c.l.b16 %v699
    %v732 = vunpack.c.l.b16 %v700
    %v733 = vunpack.c.l.b16 %v701
    %v734 = vunpack.c.l.b16 %v702
    %v735 = vpack.c.b16 %v720, %v719
    %v736 = vpack.c.b16 %v722, %v721
    %v737 = vpack.c.b16 %v724, %v723
    %v738 = vpack.c.b16 %v726, %v725
    %v739 = vpack.c.b16 %v728, %v727
    %v740 = vpack.c.b16 %v730, %v729
    %v741 = vpack.c.b16 %v732, %v731
    %v742 = vpack.c.b16 %v734, %v733
    %751 = vmatpush.bf16.msra.mxu0 %v742
    %752 = vmatpush.bf16.msra.mxu0 %v741
    %753 = vmatpush.bf16.msra.mxu0 %v740
    %754 = vmatpush.bf16.msra.mxu0 %v739
    %755 = vmatpush.bf16.msra.mxu0 %v738
    %756 = vmatpush.bf16.msra.mxu0 %v737
    %757 = vmatpush.bf16.msra.mxu0 %v736
    %758 = vmatpush.bf16.msra.mxu0 %v735
    %759 = vmatmul.bf16.gmra.mxu0 %v686
    %v760 = vpop.f32.mrf.mxu0
    %v761 = vadd.f32 0.0, %v760
    %v762 = vpop.f32.mrf.mxu0
    %v763 = vadd.f32 0.0, %v762
    %764 = vdwg.mxu0
    %v765 = vld [vmem:[%s328] sm:$0xf]
    %v766 = vld [vmem:[%s328 + $0x4] sm:$0xf]
    %v767 = vld [vmem:[%s328 + $0x8] sm:$0xf]
    %v768 = vld [vmem:[%s328 + $0xc] sm:$0xf]
    %v769 = vld [vmem:[%s328 + $0x10] sm:$0xf]
    %v770 = vld [vmem:[%s328 + $0x14] sm:$0xf]
    %v771 = vld [vmem:[%s328 + $0x18] sm:$0xf]
    %v772 = vld [vmem:[%s328 + $0x1c] sm:$0xf]
    %v773 = vld [vmem:[%s328 + $0x20] sm:$0xf]
    %v774 = vld [vmem:[%s328 + $0x24] sm:$0xf]
    %v775 = vld [vmem:[%s328 + $0x28] sm:$0xf]
    %v776 = vld [vmem:[%s328 + $0x2c] sm:$0xf]
    %v777 = vld [vmem:[%s328 + $0x30] sm:$0xf]
    %v778 = vld [vmem:[%s328 + $0x34] sm:$0xf]
    %v779 = vld [vmem:[%s328 + $0x38] sm:$0xf]
    %v780 = vld [vmem:[%s328 + $0x3c] sm:$0xf]
    %v781 = vld [vmem:[%s345] sm:$0xf]
    %v782 = vld [vmem:[%s345 + $0x4] sm:$0xf]
    %v783 = vld [vmem:[%s345 + $0x8] sm:$0xf]
    %v784 = vld [vmem:[%s345 + $0xc] sm:$0xf]
    %v785 = vld [vmem:[%s345 + $0x10] sm:$0xf]
    %v786 = vld [vmem:[%s345 + $0x14] sm:$0xf]
    %v787 = vld [vmem:[%s345 + $0x18] sm:$0xf]
    %v788 = vld [vmem:[%s345 + $0x1c] sm:$0xf]
    %v789 = vld [vmem:[%s345 + $0x20] sm:$0xf]
    %v790 = vld [vmem:[%s345 + $0x24] sm:$0xf]
    %v791 = vld [vmem:[%s345 + $0x28] sm:$0xf]
    %v792 = vld [vmem:[%s345 + $0x2c] sm:$0xf]
    %v793 = vld [vmem:[%s345 + $0x30] sm:$0xf]
    %v794 = vld [vmem:[%s345 + $0x34] sm:$0xf]
    %v795 = vld [vmem:[%s345 + $0x38] sm:$0xf]
    %v796 = vld [vmem:[%s345 + $0x3c] sm:$0xf]
    %v813 = vunpack.c.l.b16 %v781
    %v814 = vunpack.c.l.b16 %v782
    %v815 = vunpack.c.l.b16 %v783
    %v816 = vunpack.c.l.b16 %v784
    %v817 = vunpack.c.l.b16 %v785
    %v818 = vunpack.c.l.b16 %v786
    %v819 = vunpack.c.l.b16 %v787
    %v820 = vunpack.c.l.b16 %v788
    %v821 = vunpack.c.l.b16 %v789
    %v822 = vunpack.c.l.b16 %v790
    %v823 = vunpack.c.l.b16 %v791
    %v824 = vunpack.c.l.b16 %v792
    %v825 = vunpack.c.l.b16 %v793
    %v826 = vunpack.c.l.b16 %v794
    %v827 = vunpack.c.l.b16 %v795
    %v828 = vunpack.c.l.b16 %v796
    %v829 = vpack.c.b16 %v814, %v813
    %v830 = vpack.c.b16 %v816, %v815
    %v831 = vpack.c.b16 %v818, %v817
    %v832 = vpack.c.b16 %v820, %v819
    %v833 = vpack.c.b16 %v822, %v821
    %v834 = vpack.c.b16 %v824, %v823
    %v835 = vpack.c.b16 %v826, %v825
    %v836 = vpack.c.b16 %v828, %v827
    %845 = vmatpush.bf16.msra.mxu0 %v836
    %846 = vmatpush.bf16.msra.mxu0 %v835
    %847 = vmatpush.bf16.msra.mxu0 %v834
    %848 = vmatpush.bf16.msra.mxu0 %v833
    %849 = vmatpush.bf16.msra.mxu0 %v832
    %850 = vmatpush.bf16.msra.mxu0 %v831
    %851 = vmatpush.bf16.msra.mxu0 %v830
    %852 = vmatpush.bf16.msra.mxu0 %v829
    %853 = vmatmul.bf16.gmra.mxu0 %v686
    %v854 = vpop.f32.mrf.mxu0
    %v855 = vadd.f32 0.0, %v854
    %v856 = vpop.f32.mrf.mxu0
    %v857 = vadd.f32 0.0, %v856
    %858 = vdwg.mxu0
    %v861 = vrot.slane %v761, 7
    %v862 = vrot.slane %v763, 7
    %v863 = vsel %vm186, %v861, %v862
    %v866 = vsel %vm186, 0.0, %v861
    %v883 = vunpack.c.l.b16 %v765
    %v884 = vunpack.c.l.b16 %v766
    %v885 = vunpack.c.l.b16 %v767
    %v886 = vunpack.c.l.b16 %v768
    %v887 = vunpack.c.l.b16 %v769
    %v888 = vunpack.c.l.b16 %v770
    %v889 = vunpack.c.l.b16 %v771
    %v890 = vunpack.c.l.b16 %v772
    %v891 = vunpack.c.l.b16 %v773
    %v892 = vunpack.c.l.b16 %v774
    %v893 = vunpack.c.l.b16 %v775
    %v894 = vunpack.c.l.b16 %v776
    %v895 = vunpack.c.l.b16 %v777
    %v896 = vunpack.c.l.b16 %v778
    %v897 = vunpack.c.l.b16 %v779
    %v898 = vunpack.c.l.b16 %v780
    %v899 = vpack.c.b16 %v884, %v883
    %v900 = vpack.c.b16 %v886, %v885
    %v901 = vpack.c.b16 %v888, %v887
    %v902 = vpack.c.b16 %v890, %v889
    %v903 = vpack.c.b16 %v892, %v891
    %v904 = vpack.c.b16 %v894, %v893
    %v905 = vpack.c.b16 %v896, %v895
    %v906 = vpack.c.b16 %v898, %v897
    %915 = vmatpush.bf16.msra.mxu0 %v906
    %916 = vmatpush.bf16.msra.mxu0 %v905
    %917 = vmatpush.bf16.msra.mxu0 %v904
    %918 = vmatpush.bf16.msra.mxu0 %v903
    %919 = vmatpush.bf16.msra.mxu0 %v902
    %920 = vmatpush.bf16.msra.mxu0 %v901
    %921 = vmatpush.bf16.msra.mxu0 %v900
    %922 = vmatpush.bf16.msra.mxu0 %v899
    %923 = vmatmul.bf16.gmra.mxu0 %v686
    %v924 = vpop.f32.mrf.mxu0
    %v925 = vadd.f32 %v866, %v924
    %v926 = vpop.f32.mrf.mxu0
    %v927 = vadd.f32 %v863, %v926
    %928 = vdwg.mxu0
    %v931 = vrot.slane %v855, 1
    %v932 = vrot.slane %v857, 1
    %v933 = vsel %vm233, %v931, %v932
    %v936 = vsel %vm233, %v932, 0.0
    %v937 = vadd.f32 %v925, %v933
    %v938 = vadd.f32 %v927, %v936
    %v939 = vadd.f32 %v937, %v505
    %v940 = vadd.f32 %v938, %v505
    %v941 = vmax.f32 %v939, 0.0
    %v942 = vmax.f32 %v940, 0.0
    %v943 = vpack.c.bf16 %v941, %v941
    %v944 = vpack.c.bf16 %v942, %v942
    %s945 = scalar_lea.vmem [#allocation8], 8
    %946 = vst [vmem:[%s945] sm:$0xf] %v943
    %947 = vst [vmem:[%s945 + $0x4] sm:$0xf] %v944
    // Predicated region
    $region34: #{tpu_custom_call.1} parent=1 // pred_check
      _
    $region35: #{tpu_custom_call.1} parent=1 // pred_check_branch
      %949 = sbr.rel (0) target = $region37
    $region36: #{tpu_custom_call.1} parent=1 // pred_region
      %951 = vsyncadd [#allocation4], 0
      %s952 = sshll.u32 [#allocation8], 4
      %s953 = int_to_ptr.vmem [resolvable:$true] %s952
      %s954 = sshll.u32 %s5, 4
      %s955 = int_to_ptr.hbm [resolvable:$true] %s954
      %960 = dma.vmem_to_hbm [thread:$0]  %s953, 256, %s955, [#allocation4], 64, 64, 4
    $region37: #{tpu_custom_call.1} parent=1 // pred_fallthru
      _
    // Predicated region
    $region38: #{tpu_custom_call.1} parent=1 // pred_check
      _
    $region39: #{tpu_custom_call.1} parent=1 // pred_check_branch
      %962 = sbr.rel (0) target = $region41
    $region40: #{tpu_custom_call.1} parent=1 // pred_region
      %964 = dma.done [#allocation4], 256
    $region41: #{tpu_custom_call.1} parent=1 // pred_fallthru
      _
    %965 = vsyncpa [#allocation3], 1
    %966 = vsyncpa [#allocation6], 1
    %967 = vsyncpa [#allocation4], 1

</llo_original>
